<compile_context>
chip_gen: v7x
topology: tpu7x:2x2x1
jax: 0.10.0
libtpu: 0.0.40
codegen_flags: <defaults>
</compile_context>

<pallas_src>
from functools import partial

import jax
import jax.numpy as jnp
from jax.experimental import pallas as pl
from jax.experimental.pallas import tpu as pltpu


def _round_up(a, b):
    return (a + b - 1) // b * b


def hard_kernel(x_ref, lam_ref, o_ref):
    x = x_ref[...]          # (TILE_R, TILE_N)
    lam = lam_ref[...]      # (TILE_R, 1) -> broadcasts across the lane axis
    # (x > lam) + (x < -lam) reproduces mask1 + mask2 of the reference exactly,
    # including NaN propagation (0 * NaN = NaN) and lambdas < 0 (mask sum == 2).
    mask = (x > lam).astype(x.dtype) + (x < -lam).astype(x.dtype)
    o_ref[...] = mask * x


@partial(jax.jit, static_argnames=("tile_rows", "tile_cols"))
def hard(x, lambdas, *, tile_rows=512, tile_cols=1024):
    """x: (B, C, N); lambdas: (1, C, 1). Returns (B, C, N), same dtype as x."""
    B, C, N = x.shape
    R = B * C

    # Tile sizes: multiples of (8, 128), capped by the (padded) problem size.
    tr = min(tile_rows, _round_up(R, 8))
    tn = min(tile_cols, _round_up(N, 128))
    rp = _round_up(R, tr)
    np_ = _round_up(N, tn)

    # Flatten (free: contiguous) and zero-pad to full tiles only if required,
    # so stores stay unmasked / lane-dense.
    x2 = x.reshape(R, N)
    if rp != R or np_ != N:
        x2 = jnp.pad(x2, ((0, rp - R), (0, np_ - N)))

    # Per-row lambda (row = b * C + c -> lambda[c]); a few KB at most.
    lam_rows = jnp.broadcast_to(
        lambdas.reshape(1, C).astype(x.dtype), (B, C)
    ).reshape(R, 1)
    if rp != R:
        lam_rows = jnp.pad(lam_rows, ((0, rp - R), (0, 0)))

    out = pl.pallas_call(
        hard_kernel,
        out_shape=jax.ShapeDtypeStruct((rp, np_), x.dtype),
        grid=(rp // tr, np_ // tn),
        in_specs=[
            pl.BlockSpec((tr, tn), lambda r, n: (r, n)),
            pl.BlockSpec((tr, 1), lambda r, n: (r, 0)),
        ],
        out_specs=pl.BlockSpec((tr, tn), lambda r, n: (r, n)),
        compiler_params=pltpu.CompilerParams(
            dimension_semantics=("parallel", "parallel"),
            vmem_limit_bytes=32 * 1024 * 1024,
        ),
    )(x2, lam_rows)

    if rp != R or np_ != N:
        out = out[:R, :N]
    return out.reshape(B, C, N)


def hard_reference(x, lambdas):
    m1 = (x > lambdas).astype(x.dtype)
    m2 = (x < -lambdas).astype(x.dtype)
    return m1 * x + m2 * x


if __name__ == "__main__":
    # Deterministic params matching Hard.__init__(chan_num, init_lambdas)
    B, C, N = 2, 4, 512
    init_lambdas = 0.001
    lambdas = init_lambdas * jnp.ones((1, C, 1), dtype=jnp.float32)

    # Small-magnitude input so both threshold branches and the zero region are hit.
    key = jax.random.PRNGKey(0)
    x = 0.003 * jax.random.normal(key, (B, C, N), dtype=jnp.float32)

    out = hard(x, lambdas)
    out = jax.block_until_ready(out)

    ref = hard_reference(x, lambdas)
    assert out.shape == (B, C, N)
    assert jnp.allclose(out, ref, atol=1e-6, rtol=1e-6)

    print("KERNEL_OK")
</pallas_src>

<mosaic_0001>
module attributes {stable_mosaic.version = 11 : i64} {
  func.func @hard_kernel(%arg0: i32, %arg1: i32, %arg2: memref<8x512xf32, #tpu.memory_space<vmem>>, %arg3: memref<8x1xf32, #tpu.memory_space<vmem>>, %arg4: memref<8x512xf32, #tpu.memory_space<vmem>>) attributes {dimension_semantics = [#tpu.dimension_semantics<parallel>, #tpu.dimension_semantics<parallel>], iteration_bounds = array<i64: 1, 1>, scalar_prefetch = 0 : i64, scratch_operands = 0 : i64, tpu.core_type = #tpu.core_type<tc>, window_params = [{transform_indices = @transform_0, window_bounds = array<i64: 8, 512>}, {transform_indices = @transform_1, window_bounds = array<i64: 8, 1>}, {transform_indices = @transform_2, window_bounds = array<i64: 8, 512>}]} {
    %c0 = arith.constant 0 : index
    %c0_0 = arith.constant 0 : index
    %0 = vector.load %arg2[%c0, %c0_0] : memref<8x512xf32, #tpu.memory_space<vmem>>, vector<8x512xf32>
    %c0_1 = arith.constant 0 : index
    %c0_2 = arith.constant 0 : index
    %1 = vector.load %arg3[%c0_1, %c0_2] : memref<8x1xf32, #tpu.memory_space<vmem>>, vector<8x1xf32>
    %2 = vector.broadcast %1 : vector<8x1xf32> to vector<8x512xf32>
    %3 = arith.cmpf ogt, %0, %2 : vector<8x512xf32>
    %4 = arith.extui %3 : vector<8x512xi1> to vector<8x512xi32>
    %5 = arith.sitofp %4 : vector<8x512xi32> to vector<8x512xf32>
    %cst = arith.constant 0.000000e+00 : f32
    %6 = vector.broadcast %cst : f32 to vector<8x1xf32>
    %7 = arith.subf %6, %1 : vector<8x1xf32>
    %8 = vector.broadcast %7 : vector<8x1xf32> to vector<8x512xf32>
    %9 = arith.cmpf olt, %0, %8 : vector<8x512xf32>
    %10 = arith.extui %9 : vector<8x512xi1> to vector<8x512xi32>
    %11 = arith.sitofp %10 : vector<8x512xi32> to vector<8x512xf32>
    %12 = arith.addf %5, %11 : vector<8x512xf32>
    %13 = arith.mulf %12, %0 : vector<8x512xf32>
    %c0_3 = arith.constant 0 : index
    %c0_4 = arith.constant 0 : index
    %14 = vector.load %arg4[%c0_3, %c0_4] : memref<8x512xf32, #tpu.memory_space<vmem>>, vector<8x512xf32>
    tpu.vector_store %arg4[%c0_3, %c0_4], %13 {strides = array<i32>} : memref<8x512xf32, #tpu.memory_space<vmem>>, vector<8x512xf32>,
    return
  }
  func.func @transform_0(%arg0: i32, %arg1: i32) -> (i32, i32) {
    %c0_i32 = arith.constant 0 : i32
    return %arg0, %arg1 : i32, i32
  }
  func.func @transform_1(%arg0: i32, %arg1: i32) -> (i32, i32) {
    %c0_i32 = arith.constant 0 : i32
    %c0_i32_0 = arith.constant 0 : i32
    return %arg0, %c0_i32 : i32, i32
  }
  func.func @transform_2(%arg0: i32, %arg1: i32) -> (i32, i32) {
    %c0_i32 = arith.constant 0 : i32
    return %arg0, %arg1 : i32, i32
  }
}

</mosaic_0001>

<llo_original>
// kernel: hard.1
$region0: #{hard.1}
  #allocation0 [shape = 'u32[]', space=smem, size = 0x4, offset = 0x4, fixed_abs, tag = 'smem constant byte address 0x4 - core index']
  #allocation1 [shape = 'u32[144,128]{1,0:T(1,128)}', space=vmem, size = 0x12000, scoped, tag = 'internal scratch']
  %s0 = inlined_call_operand.vmem [shape: f32[8,512], index: 0, kind: input, shape index: {}]
  %s1 = inlined_call_operand.vmem [shape: f32[8,1], index: 1, kind: input, shape index: {}]
  %s2 = inlined_call_operand.vmem [shape: f32[8,512], index: 2, kind: output, shape index: {}]
  %s3 = sld [smem:[#allocation0]]
  $region18: #{hard.1} parent=0
    _
  %s5 = ssub.s32 1, %s3
  %s6 = scalar_select 0, %s5, %s3
  // Predicated region
  $region2: #{hard.1} parent=0 // pred_check
    _
  $region3: #{hard.1} parent=0 // pred_check_branch
    %8 = sbr.rel (0) target = $region5
  $region4: #{hard.1} parent=0 // pred_region
    _
  $region5: #{hard.1} parent=0 // pred_fallthru
    _
  // Predicated region
  $region6: #{hard.1} parent=0 // pred_check
    _
  $region7: #{hard.1} parent=0 // pred_check_branch
    %10 = sbr.rel (0) target = $region9
  $region8: #{hard.1} parent=0 // pred_region
    _
  $region9: #{hard.1} parent=0 // pred_fallthru
    _
  %v11 = vld [vmem:[%s0] sm:$0xff]
  %v12 = vld [vmem:[%s0 + $0x8] sm:$0xff]
  %v13 = vld [vmem:[%s0 + $0x10] sm:$0xff]
  %v14 = vld [vmem:[%s0 + $0x18] sm:$0xff]
  %v15 = vld [vmem:[%s1] sm:$0xff]
  %17 = vset.pattern.permute.xlu0 0
  %18 = vperm.xlu0 %17, %v15
  %v19 = vpop.permute.xlu0 %18
  %vm21 = vcmp.gt.f32.partialorder %v11, %v19
  %vm22 = vcmp.gt.f32.partialorder %v12, %v19
  %vm23 = vcmp.gt.f32.partialorder %v13, %v19
  %vm24 = vcmp.gt.f32.partialorder %v14, %v19
  %v25 = vsel %vm21, 1, 0
  %v26 = vsel %vm22, 1, 0
  %v27 = vsel %vm23, 1, 0
  %v28 = vsel %vm24, 1, 0
  %v29 = vcvt.s32.f32 %v25
  %v30 = vcvt.s32.f32 %v26
  %v31 = vcvt.s32.f32 %v27
  %v32 = vcvt.s32.f32 %v28
  %v33 = vsub.f32 0.0, %v15
  %35 = vset.pattern.permute.xlu0 0
  %36 = vperm.xlu0 %35, %v33
  %v37 = vpop.permute.xlu0 %36
  %vm39 = vcmp.lt.f32.partialorder %v11, %v37
  %vm40 = vcmp.lt.f32.partialorder %v12, %v37
  %vm41 = vcmp.lt.f32.partialorder %v13, %v37
  %vm42 = vcmp.lt.f32.partialorder %v14, %v37
  %v43 = vsel %vm39, 1, 0
  %v44 = vsel %vm40, 1, 0
  %v45 = vsel %vm41, 1, 0
  %v46 = vsel %vm42, 1, 0
  %v47 = vcvt.s32.f32 %v43
  %v48 = vcvt.s32.f32 %v44
  %v49 = vcvt.s32.f32 %v45
  %v50 = vcvt.s32.f32 %v46
  %v51 = vadd.f32 %v29, %v47
  %v52 = vadd.f32 %v30, %v48
  %v53 = vadd.f32 %v31, %v49
  %v54 = vadd.f32 %v32, %v50
  %v55 = vmul.f32 %v51, %v11
  %v56 = vmul.f32 %v52, %v12
  %v57 = vmul.f32 %v53, %v13
  %v58 = vmul.f32 %v54, %v14
  %59 = vst [vmem:[%s2] sm:$0xff] %v55
  %60 = vst [vmem:[%s2 + $0x8] sm:$0xff] %v56
  %61 = vst [vmem:[%s2 + $0x10] sm:$0xff] %v57
  %62 = vst [vmem:[%s2 + $0x18] sm:$0xff] %v58
  // Predicated region
  $region10: #{hard.1} parent=0 // pred_check
    _
  $region11: #{hard.1} parent=0 // pred_check_branch
    %64 = sbr.rel (0) target = $region13
  $region12: #{hard.1} parent=0 // pred_region
    _
  $region13: #{hard.1} parent=0 // pred_fallthru
    _
  // Predicated region
  $region14: #{hard.1} parent=0 // pred_check
    _
  $region15: #{hard.1} parent=0 // pred_check_branch
    %66 = sbr.rel (0) target = $region17
  $region16: #{hard.1} parent=0 // pred_region
    _
  $region17: #{hard.1} parent=0 // pred_fallthru
    _

</llo_original>
